<compile_context>
chip_gen: v7x
topology: tpu7x:2x2x1
jax: 0.10.0
libtpu: 0.0.40
codegen_flags: <defaults>
</compile_context>

<pallas_src>
import math

import jax
import jax.numpy as jnp
from jax.experimental import pallas as pl
from jax.experimental.pallas import tpu as pltpu


# Budget for 2 inputs x 2 pipeline buffers of the big blocks; leaves headroom
# under the smallest default scoped VMEM (16 MiB on v5e).
_VMEM_BUDGET_BYTES = 12 * 1024 * 1024


def _pick_lane_tile(f2, row_block, itemsize):
    """Largest multiple-of-128 divisor of f2 whose double-buffered working set
    (2 inputs x 2 buffers x row_block x tile) fits the VMEM budget."""
    if f2 % 128 != 0:
        # TODO(synk): pad/mask ragged feature tails instead of one big block.
        return f2
    cap = max(128, _VMEM_BUDGET_BYTES // (4 * row_block * itemsize))
    cap = (cap // 128) * 128
    best = 128
    d = 128
    limit = min(f2, cap)
    while d <= limit:
        if f2 % d == 0:
            best = d
        d += 128
    return best


def _pair_sums_kernel(s1_ref, s2_ref, out_ref):
    # Block shapes: s1/s2 -> (RB, TF); out -> (RB, 3), resident across the
    # reduction axis (grid axis 1) and used as an f32 accumulator.
    @pl.when(pl.program_id(1) == 0)
    def _():
        out_ref[...] = jnp.zeros_like(out_ref)

    s1 = s1_ref[...].astype(jnp.float32)
    s2 = s2_ref[...].astype(jnp.float32)
    out_ref[...] += jnp.concatenate(
        [
            jnp.sum(s1 * s1, axis=-1, keepdims=True),
            jnp.sum(s2 * s2, axis=-1, keepdims=True),
            jnp.sum(s1 * s2, axis=-1, keepdims=True),
        ],
        axis=-1,
    )


def _pair_sums(s1, s2):
    """Per-row [sum(s1^2), sum(s2^2), sum(s1*s2)] for 2-D views (rows, F2)."""
    rows, f2 = s1.shape
    rb = 8 if rows % 8 == 0 else rows          # row block (sublane-aligned)
    itemsize = max(s1.dtype.itemsize, s2.dtype.itemsize)
    tf = _pick_lane_tile(f2, rb, itemsize)     # lane-axis tile
    grid = (rows // rb, f2 // tf)
    return pl.pallas_call(
        _pair_sums_kernel,
        grid=grid,
        in_specs=[
            pl.BlockSpec((rb, tf), lambda r, k: (r, k)),
            pl.BlockSpec((rb, tf), lambda r, k: (r, k)),
        ],
        out_specs=pl.BlockSpec((rb, 3), lambda r, k: (r, 0)),
        out_shape=jax.ShapeDtypeStruct((rows, 3), jnp.float32),
        compiler_params=pltpu.CompilerParams(
            dimension_semantics=("parallel", "arbitrary")
        ),
    )(s1, s2)


def factor_loss(sample1, sample2, logdet1, logdet2, factors, rho=0.975):
    """JAX/Pallas port of FactorLoss.forward.

    sample1, sample2: lists of arrays, each (B, C, H, W)
    logdet1, logdet2: (B,) float32
    factors: (B,) int32
    """
    rho = float(rho)
    n_factors = len(sample1)
    B = sample1[0].shape[0]

    nll1_means = []
    nll2_means = []
    for i in range(n_factors):
        s1 = sample1[i]
        s2 = sample2[i]
        F = int(math.prod(s1.shape[1:]))

        # Fold part of F into the sublane axis so small batches fill vregs.
        R = 8 if F % 8 == 0 else (4 if F % 4 == 0 else (2 if F % 2 == 0 else 1))
        F2 = F // R
        s1v = s1.reshape(B * R, F2)   # free: contiguous row-major reshape
        s2v = s2.reshape(B * R, F2)

        sums = _pair_sums(s1v, s2v)                    # (B*R, 3) f32
        sums = sums.reshape(B, R, 3).sum(axis=1)       # tiny epilogue -> (B, 3)
        A = sums[:, 0]       # sum(s1^2) per batch element
        Bs = sums[:, 1]      # sum(s2^2)
        C = sums[:, 2]       # sum(s1*s2)

        # factor_mask[i] = (factors == i) | ((factors < 0) & (factors != -i))
        m = ((factors == i) | ((factors < 0) & (factors != -i))).astype(
            jnp.float32)

        nll1_means.append(jnp.mean(0.5 * A))

        # 0.5*sum((s2 - m*rho*s1)^2) expanded exactly (m in {0,1} => m^2 == m)
        nll2 = 0.5 * (Bs - 2.0 * rho * m * C + (rho * rho) * m * A)
        nll2 = nll2 / (1.0 - m * (rho * rho))
        nll2_means.append(jnp.mean(nll2))

    loss1 = sum(nll1_means) - jnp.mean(logdet1)
    loss2 = sum(nll2_means) - jnp.mean(logdet2)
    loss = loss1 + loss2
    log = {"images": {},
           "scalars": {"loss": loss, "loss1": loss1, "loss2": loss2}}
    return loss, log


def _reference_factor_loss(sample1, sample2, logdet1, logdet2, factors,
                           rho=0.975):
    """Pure-JAX mirror of the torch code, for correctness checking."""
    def nll(x):
        return 0.5 * jnp.sum(x ** 2, axis=(1, 2, 3))

    nll_loss1 = jnp.mean(nll(jnp.concatenate(sample1, axis=1)))
    loss1 = nll_loss1 - jnp.mean(logdet1)

    n = len(sample2)
    factor_mask = [
        ((factors == i) | ((factors < 0) & (factors != -i)))
        .astype(sample2[i].dtype)[:, None, None, None]
        for i in range(n)
    ]
    sample2_cond = [sample2[i] - factor_mask[i] * rho * sample1[i]
                    for i in range(n)]
    nll2 = [nll(sample2_cond[i]) /
            (1.0 - factor_mask[i][:, 0, 0, 0] * rho ** 2) for i in range(n)]
    nll_loss2 = sum(jnp.mean(v) for v in nll2)
    loss2 = nll_loss2 - jnp.mean(logdet2)
    return loss1 + loss2


if __name__ == "__main__":
    key = jax.random.PRNGKey(0)
    B, C, H, W = 2, 4, 16, 16
    n_factors = 2
    rho = 0.975

    keys = jax.random.split(key, 2 * n_factors + 2)
    sample1 = [jax.random.normal(keys[i], (B, C, H, W), jnp.float32)
               for i in range(n_factors)]
    sample2 = [jax.random.normal(keys[n_factors + i], (B, C, H, W),
                                 jnp.float32) for i in range(n_factors)]
    logdet1 = jax.random.normal(keys[-2], (B,), jnp.float32)
    logdet2 = jax.random.normal(keys[-1], (B,), jnp.float32)
    factors = jnp.array([0, -1], dtype=jnp.int32)   # (B,)

    loss, log = factor_loss(sample1, sample2, logdet1, logdet2, factors, rho)
    loss = jax.block_until_ready(loss)

    ref = _reference_factor_loss(sample1, sample2, logdet1, logdet2, factors,
                                 rho)
    ref = jax.block_until_ready(ref)
    assert jnp.allclose(loss, ref, rtol=1e-4, atol=1e-4), (loss, ref)

    print("KERNEL_OK")
</pallas_src>

<mosaic_0001>
module attributes {stable_mosaic.version = 11 : i64} {
  func.func @_pair_sums_kernel(%arg0: i32, %arg1: i32, %arg2: memref<8x128xf32, #tpu.memory_space<vmem>>, %arg3: memref<8x128xf32, #tpu.memory_space<vmem>>, %arg4: memref<8x3xf32, #tpu.memory_space<vmem>>) attributes {dimension_semantics = [#tpu.dimension_semantics<parallel>, #tpu.dimension_semantics<arbitrary>], iteration_bounds = array<i64: 2, 1>, scalar_prefetch = 0 : i64, scratch_operands = 0 : i64, tpu.core_type = #tpu.core_type<tc>, window_params = [{transform_indices = @transform_0, window_bounds = array<i64: 8, 128>}, {transform_indices = @transform_1, window_bounds = array<i64: 8, 128>}, {transform_indices = @transform_2, window_bounds = array<i64: 8, 3>}]} {
    %c0_i32 = arith.constant 0 : i32
    %0 = arith.cmpi eq, %arg1, %c0_i32 : i32
    %1 = arith.extui %0 : i1 to i32
    %c0_i32_0 = arith.constant 0 : i32
    %2 = arith.cmpi ne, %1, %c0_i32_0 : i32
    scf.if %2 {
      %cst_10 = arith.constant 0.000000e+00 : f32
      %18 = vector.broadcast %cst_10 : f32 to vector<8x3xf32>
      %c0_11 = arith.constant 0 : index
      %c0_12 = arith.constant 0 : index
      %19 = vector.load %arg4[%c0_11, %c0_12] : memref<8x3xf32, #tpu.memory_space<vmem>>, vector<8x3xf32>
      tpu.vector_store %arg4[%c0_11, %c0_12], %18 {strides = array<i32>} : memref<8x3xf32, #tpu.memory_space<vmem>>, vector<8x3xf32>,
    } else {
    }
    %c0 = arith.constant 0 : index
    %c0_1 = arith.constant 0 : index
    %3 = vector.load %arg2[%c0, %c0_1] : memref<8x128xf32, #tpu.memory_space<vmem>>, vector<8x128xf32>
    %c0_2 = arith.constant 0 : index
    %c0_3 = arith.constant 0 : index
    %4 = vector.load %arg3[%c0_2, %c0_3] : memref<8x128xf32, #tpu.memory_space<vmem>>, vector<8x128xf32>
    %c0_4 = arith.constant 0 : index
    %c0_5 = arith.constant 0 : index
    %5 = vector.load %arg4[%c0_4, %c0_5] : memref<8x3xf32, #tpu.memory_space<vmem>>, vector<8x3xf32>
    %6 = arith.mulf %3, %3 : vector<8x128xf32>
    %cst = arith.constant dense<0.000000e+00> : vector<8xf32>
    %7 = vector.multi_reduction <add>, %6, %cst [1] : vector<8x128xf32> to vector<8xf32>
    %8 = vector.shape_cast %7 : vector<8xf32> to vector<8x1xf32>
    %9 = arith.mulf %4, %4 : vector<8x128xf32>
    %cst_6 = arith.constant dense<0.000000e+00> : vector<8xf32>
    %10 = vector.multi_reduction <add>, %9, %cst_6 [1] : vector<8x128xf32> to vector<8xf32>
    %11 = vector.shape_cast %10 : vector<8xf32> to vector<8x1xf32>
    %12 = arith.mulf %3, %4 : vector<8x128xf32>
    %cst_7 = arith.constant dense<0.000000e+00> : vector<8xf32>
    %13 = vector.multi_reduction <add>, %12, %cst_7 [1] : vector<8x128xf32> to vector<8xf32>
    %14 = vector.shape_cast %13 : vector<8xf32> to vector<8x1xf32>
    %15 = tpu.concatenate %8, %11, %14 in 1 : vector<8x1xf32>, vector<8x1xf32>, vector<8x1xf32> -> vector<8x3xf32>
    %16 = arith.addf %5, %15 : vector<8x3xf32>
    %c0_8 = arith.constant 0 : index
    %c0_9 = arith.constant 0 : index
    %17 = vector.load %arg4[%c0_8, %c0_9] : memref<8x3xf32, #tpu.memory_space<vmem>>, vector<8x3xf32>
    tpu.vector_store %arg4[%c0_8, %c0_9], %16 {strides = array<i32>} : memref<8x3xf32, #tpu.memory_space<vmem>>, vector<8x3xf32>,
    return
  }
  func.func @transform_0(%arg0: i32, %arg1: i32) -> (i32, i32) {
    %c0_i32 = arith.constant 0 : i32
    return %arg0, %arg1 : i32, i32
  }
  func.func @transform_1(%arg0: i32, %arg1: i32) -> (i32, i32) {
    %c0_i32 = arith.constant 0 : i32
    return %arg0, %arg1 : i32, i32
  }
  func.func @transform_2(%arg0: i32, %arg1: i32) -> (i32, i32) {
    %c0_i32 = arith.constant 0 : i32
    %c0_i32_0 = arith.constant 0 : i32
    return %arg0, %c0_i32 : i32, i32
  }
}

</mosaic_0001>

<llo_original>
// kernel: tpu_custom_call.1
$region0: #{tpu_custom_call.1}
  #allocation0 [shape = 'u32[]', space=smem, size = 0x4, offset = 0x4, fixed_abs, tag = 'smem constant byte address 0x4 - core index']
  #allocation1 [shape = 'u32[144,128]{1,0:T(1,128)}', space=vmem, size = 0x12000, scoped, tag = 'internal scratch']
  %s0 = inlined_call_operand.hbm [shape: f32[16,128], index: 0, kind: input, shape index: {}]
  %s1 = inlined_call_operand.hbm [shape: f32[16,128], index: 1, kind: input, shape index: {}]
  %s2 = inlined_call_operand.vmem [shape: f32[16,3], index: 2, kind: output, shape index: {}]
  %s3 = sld [smem:[#allocation0]]
  $region53: #{tpu_custom_call.1} parent=0
    _
  %s5 = ssub.s32 1, %s3
  %s6 = scalar_select 0, %s5, %s3
  $region1: #{tpu_custom_call.1} parent=0
    #allocation2 [shape = 'u8[8192]{0}', space=vmem, size = 0x2000, scoped, tag = 'input window, operand 0']
    #allocation3 [shape = 's32[2]{0}', space=sflag, size = 0x8, scoped, tag = 'scoped memory for tpu_custom_call.1']
    #allocation4 [shape = 'u8[8192]{0}', space=vmem, size = 0x2000, scoped, tag = 'input window, operand 1']
    #allocation5 [shape = 's32[2]{0}', space=sflag, size = 0x8, scoped, tag = 'scoped memory for tpu_custom_call.1']
    %7 = vsyncpa [#allocation3], 0
    %s8 = scalar_lea.sflag [#allocation3], 1
    %9 = vsyncpa %s8, 0
    %10 = vsyncpa [#allocation5], 0
    %s11 = scalar_lea.sflag [#allocation5], 1
    %12 = vsyncpa %s11, 0
    loop: start=0, step=1, limit=4
    $region2: #{tpu_custom_call.1} parent=1 // loop_pre_header
      _
    $region3: #{tpu_custom_call.1} parent=1 // loop_header
      %s14 = sphi 0, %s18
      %p15 = scmp.ge.s32.totalorder %s14, 4
      %s21 = sphi 0, %s33
      %s22 = sphi 0, %s29
      %s23 = sphi 0, %s21
      %s24 = sphi 0, %s22
      %s25 = sphi 0, %s23
      %s26 = sphi 0, %s24
      %s38 = sphi 0, %s40
      %s41 = sphi 0, %s38
      %s42 = sphi 0, %s41
      %s58 = sphi 0, %s42
      %s66 = sphi 0, %s68
      %s69 = sphi 0, %s66
      %s70 = sphi 0, %s69
      %s86 = sphi 0, %s70
      %s92 = sphi 0, %s94
      %s95 = sphi 0, %s92
      %s96 = sphi 0, %s95
      %s112 = sphi 0, %s96
    $region4: #{tpu_custom_call.1} parent=1 // loop_header_branch
      %17 = sbr.rel (%p15) target = $region8
    $region5: #{tpu_custom_call.1} parent=1 // loop_body
      %s19 = ssub.s32 %s14, 1
      %s20 = ssub.s32 %s14, 2
      %s27 = sadd.s32 1, %s22
      %p28 = scmp.ge.s32.totalorder %s27, 1
      %s29 = scalar_select %p28, 0, %s27
      %s30 = sadd.s32 1, %s21
      %s31 = scalar_select %p28, %s30, %s21
      %p32 = scmp.ge.s32.totalorder %s31, 2
      %s33 = scalar_select %p32, 0, %s31
      %s34 = ssub.s32 %s21, %s33
      %s35 = ssub.s32 %s22, %s29
      %s36 = sor.u32 %s34, %s35
      %p37 = scmp.eq.s32.totalorder %s36, 0
      %s39 = sadd.s32 %s38, 1
      %s40 = scalar_select %p37, %s38, %s39
      %p43 = pneg %p37
      %p44 = scmp.eq.s32.totalorder %s14, 1
      %p45 = por %p43, %p44
      %p46 = scmp.ne.s32.totalorder %s38, %s41
      %p47 = scmp.eq.s32.totalorder %s14, 0
      %p48 = por %p46, %p47
      %p49 = scmp.ne.s32.totalorder %s38, %s41
      %p50 = scmp.eq.s32.totalorder %s19, 1
      %p51 = por %p49, %p50
      %p52 = scmp.ne.s32.totalorder %s41, %s42
      %p53 = scmp.eq.s32.totalorder %s19, 0
      %p54 = por %p52, %p53
      %p55 = scmp.ne.s32.totalorder %s41, %s42
      %p56 = scmp.eq.s32.totalorder %s20, 1
      %p57 = por %p55, %p56
      %p59 = scmp.ne.s32.totalorder %s42, %s58
      %p60 = scmp.eq.s32.totalorder %s20, 0
      %p61 = por %p59, %p60
      %s62 = ssub.s32 %s21, %s33
      %s63 = ssub.s32 %s22, %s29
      %s64 = sor.u32 %s62, %s63
      %p65 = scmp.eq.s32.totalorder %s64, 0
      %s67 = sadd.s32 %s66, 1
      %s68 = scalar_select %p65, %s66, %s67
      %p71 = pneg %p65
      %p72 = scmp.eq.s32.totalorder %s14, 1
      %p73 = por %p71, %p72
      %p74 = scmp.ne.s32.totalorder %s66, %s69
      %p75 = scmp.eq.s32.totalorder %s14, 0
      %p76 = por %p74, %p75
      %p77 = scmp.ne.s32.totalorder %s66, %s69
      %p78 = scmp.eq.s32.totalorder %s19, 1
      %p79 = por %p77, %p78
      %p80 = scmp.ne.s32.totalorder %s69, %s70
      %p81 = scmp.eq.s32.totalorder %s19, 0
      %p82 = por %p80, %p81
      %p83 = scmp.ne.s32.totalorder %s69, %s70
      %p84 = scmp.eq.s32.totalorder %s20, 1
      %p85 = por %p83, %p84
      %p87 = scmp.ne.s32.totalorder %s70, %s86
      %p88 = scmp.eq.s32.totalorder %s20, 0
      %p89 = por %p87, %p88
      %s90 = ssub.s32 %s21, %s33
      %p91 = scmp.eq.s32.totalorder %s90, 0
      %s93 = sadd.s32 %s92, 1
      %s94 = scalar_select %p91, %s92, %s93
      %p97 = pneg %p91
      %p98 = scmp.eq.s32.totalorder %s14, 1
      %p99 = por %p97, %p98
      %p100 = scmp.ne.s32.totalorder %s92, %s95
      %p101 = scmp.eq.s32.totalorder %s14, 0
      %p102 = por %p100, %p101
      %p103 = scmp.ne.s32.totalorder %s92, %s95
      %p104 = scmp.eq.s32.totalorder %s19, 1
      %p105 = por %p103, %p104
      %p106 = scmp.ne.s32.totalorder %s95, %s96
      %p107 = scmp.eq.s32.totalorder %s19, 0
      %p108 = por %p106, %p107
      %p109 = scmp.ne.s32.totalorder %s95, %s96
      %p110 = scmp.eq.s32.totalorder %s20, 1
      %p111 = por %p109, %p110
      %p113 = scmp.ne.s32.totalorder %s96, %s112
      %p114 = scmp.eq.s32.totalorder %s20, 0
      %p115 = por %p113, %p114
      %p116 = scmp.le.s32.totalorder 1, %s14
      %p117 = scmp.lt.s32.totalorder %s14, 3
      %p118 = pnand %p116, %p117
      %p119 = pneg %p118
      // Predicated region
      $region9: #{tpu_custom_call.1} parent=5 // pred_check
        _
      $region10: #{tpu_custom_call.1} parent=5 // pred_check_branch
        %121 = sbr.rel (%p118) target = $region12
      $region11: #{tpu_custom_call.1} parent=5 // pred_region
        %s122 = ssub.s32 %s14, 1
      $region12: #{tpu_custom_call.1} parent=5 // pred_fallthru
        _
      %p123 = scmp.lt.s32.totalorder %s14, 2
      // Predicated region
      $region13: #{tpu_custom_call.1} parent=5 // pred_check
        %p124 = pneg %p123
      $region14: #{tpu_custom_call.1} parent=5 // pred_check_branch
        %126 = sbr.rel (%p124) target = $region16
      $region15: #{tpu_custom_call.1} parent=5 // pred_region
        // Predicated region
        $region17: #{tpu_custom_call.1} parent=15 // pred_check
          %p127 = pneg %p48
        $region18: #{tpu_custom_call.1} parent=15 // pred_check_branch
          %129 = sbr.rel (%p127) target = $region20
        $region19: #{tpu_custom_call.1} parent=15 // pred_region
          %s130 = sand.u32 %s38, 1
          %s131 = scalar_lea.sflag [#allocation3], %s130
          %s132 = sand.u32 %s38, 1
          %s133 = smul.addr %s132, 8
          %s134 = scalar_lea.vmem [#allocation2], %s133
          %s136 = ssub.s32 128, 128
          %137 = vsyncadd %s131, %s136
          %s138 = sadd.s32 %s22, %s21
          %s139 = smul.addr %s138, 128
          %s140 = scalar_lea.hbm %s0, %s139
          %s142 = sshll.u32 %s134, 4
          %s143 = int_to_ptr.vmem [resolvable:$true] %s142
          %145 = dma.hbm_to_vmem [thread:$0]  %s140, 128, %s143, %s131
        $region20: #{tpu_custom_call.1} parent=15 // pred_fallthru
          _
        // Predicated region
        $region21: #{tpu_custom_call.1} parent=15 // pred_check
          %p146 = pneg %p76
        $region22: #{tpu_custom_call.1} parent=15 // pred_check_branch
          %148 = sbr.rel (%p146) target = $region24
        $region23: #{tpu_custom_call.1} parent=15 // pred_region
          %s149 = sand.u32 %s66, 1
          %s150 = scalar_lea.sflag [#allocation5], %s149
          %s151 = sand.u32 %s66, 1
          %s152 = smul.addr %s151, 8
          %s153 = scalar_lea.vmem [#allocation4], %s152
          %s155 = ssub.s32 128, 128
          %156 = vsyncadd %s150, %s155
          %s157 = sadd.s32 %s22, %s21
          %s158 = smul.addr %s157, 128
          %s159 = scalar_lea.hbm %s1, %s158
          %s161 = sshll.u32 %s153, 4
          %s162 = int_to_ptr.vmem [resolvable:$true] %s161
          %164 = dma.hbm_to_vmem [thread:$0]  %s159, 128, %s162, %s150
        $region24: #{tpu_custom_call.1} parent=15 // pred_fallthru
          _
      $region16: #{tpu_custom_call.1} parent=5 // pred_fallthru
        _
      %p165 = scmp.le.s32.totalorder 1, %s14
      %p166 = scmp.lt.s32.totalorder %s14, 3
      %p167 = pnand %p165, %p166
      %p168 = pneg %p167
      // Predicated region
      $region25: #{tpu_custom_call.1} parent=5 // pred_check
        _
      $region26: #{tpu_custom_call.1} parent=5 // pred_check_branch
        %170 = sbr.rel (%p167) target = $region28
      $region27: #{tpu_custom_call.1} parent=5 // pred_region
        %s171 = ssub.s32 %s14, 1
        %s172 = sand.u32 %s41, 1
        %s173 = scalar_lea.sflag [#allocation3], %s172
        %s174 = sand.u32 %s41, 1
        %s175 = smul.addr %s174, 8
        %s176 = scalar_lea.vmem [#allocation2], %s175
        // Predicated region
        $region29: #{tpu_custom_call.1} parent=27 // pred_check
          %p177 = pneg %p54
        $region30: #{tpu_custom_call.1} parent=27 // pred_check_branch
          %179 = sbr.rel (%p177) target = $region32
        $region31: #{tpu_custom_call.1} parent=27 // pred_region
          %180 = dma.done %s173, 128
        $region32: #{tpu_custom_call.1} parent=27 // pred_fallthru
          _
        %s181 = sand.u32 %s69, 1
        %s182 = scalar_lea.sflag [#allocation5], %s181
        %s183 = sand.u32 %s69, 1
        %s184 = smul.addr %s183, 8
        %s185 = scalar_lea.vmem [#allocation4], %s184
        // Predicated region
        $region33: #{tpu_custom_call.1} parent=27 // pred_check
          %p186 = pneg %p82
        $region34: #{tpu_custom_call.1} parent=27 // pred_check_branch
          %188 = sbr.rel (%p186) target = $region36
        $region35: #{tpu_custom_call.1} parent=27 // pred_region
          %189 = dma.done %s182, 128
        $region36: #{tpu_custom_call.1} parent=27 // pred_fallthru
          _
        %s190 = sand.u32 %s41, 1
        %s191 = scalar_lea.sflag [#allocation3], %s190
        %s192 = sand.u32 %s41, 1
        %s193 = smul.addr %s192, 8
        %s194 = scalar_lea.vmem [#allocation2], %s193
        %p195 = pneg %p54
        %p196 = pneg %p51
        %s197 = sand.u32 %s69, 1
        %s198 = scalar_lea.sflag [#allocation5], %s197
        %s199 = sand.u32 %s69, 1
        %s200 = smul.addr %s199, 8
        %s201 = scalar_lea.vmem [#allocation4], %s200
        %p202 = pneg %p82
        %p203 = pneg %p79
        %p204 = pneg %p108
        %p205 = pneg %p105
        %p206 = scmp.lt.s32.totalorder %s23, 1
        %s207 = scalar_select %p206, %s23, 1
        %s208 = smul.addr %s207, 8
        %s209 = scalar_lea.vmem %s2, %s208
        %p210 = scmp.lt.s32.totalorder %s23, 1
        %s211 = scalar_select %p210, %s23, 1
        %s212 = smul.addr %s211, 8
        %s213 = scalar_lea.vmem %s2, %s212
        %p214 = scmp.eq.s32.totalorder %s24, 0
        // Predicated region
        $region37: #{tpu_custom_call.1} parent=27 // pred_check
          %p215 = pneg %p214
        $region38: #{tpu_custom_call.1} parent=27 // pred_check_branch
          %217 = sbr.rel (%p215) target = $region40
        $region39: #{tpu_custom_call.1} parent=27 // pred_region
          %vm218 = vcmask 23552
          %219 = vst.msk [vmem:[%s213] sm:$0xff] %vm218, 0.0
        $region40: #{tpu_custom_call.1} parent=27 // pred_fallthru
          _
        %v220 = vld [vmem:[%s176] sm:$0xff]
        %v221 = vld [vmem:[%s185] sm:$0xff]
        %v222 = vld [vmem:[%s213] sm:$0xff]
        %v223 = vmul.f32 %v220, %v220
        %224 = vadd.xlane.f32.xlu0 %v223
        %v225 = vpop.xlane.xlu0 %224
        %v226 = vmul.f32 %v221, %v221
        %227 = vadd.xlane.f32.xlu0 %v226
        %v228 = vpop.xlane.xlu0 %227
        %v229 = vmul.f32 %v220, %v221
        %230 = vadd.xlane.f32.xlu0 %v229
        %v231 = vpop.xlane.xlu0 %230
        %vm232 = vcmask 7168
        %v233 = vsel %vm232, %v225, %v228
        %vm234 = vcmask 15360
        %v235 = vsel %vm234, %v233, %v231
        %v236 = vadd.f32 %v222, %v235
        %vm237 = vcmask 23552
        %238 = vst.msk [vmem:[%s213] sm:$0xff] %vm237, %v236
        %p239 = scmp.lt.s32.totalorder %s23, 1
        %s240 = scalar_select %p239, %s23, 1
        %s241 = smul.addr %s240, 8
        %s242 = scalar_lea.vmem %s2, %s241
        // Predicated region
        $region41: #{tpu_custom_call.1} parent=27 // pred_check
          %p243 = pneg %p105
        $region42: #{tpu_custom_call.1} parent=27 // pred_check_branch
          %245 = sbr.rel (%p243) target = $region44
        $region43: #{tpu_custom_call.1} parent=27 // pred_region
          _
        $region44: #{tpu_custom_call.1} parent=27 // pred_fallthru
          _
      $region28: #{tpu_custom_call.1} parent=5 // pred_fallthru
        _
      %p246 = scmp.le.s32.totalorder 2, %s14
      // Predicated region
      $region45: #{tpu_custom_call.1} parent=5 // pred_check
        %p247 = pneg %p246
      $region46: #{tpu_custom_call.1} parent=5 // pred_check_branch
        %249 = sbr.rel (%p247) target = $region48
      $region47: #{tpu_custom_call.1} parent=5 // pred_region
        %s250 = ssub.s32 %s14, 2
        // Predicated region
        $region49: #{tpu_custom_call.1} parent=47 // pred_check
          %p251 = pneg %p111
        $region50: #{tpu_custom_call.1} parent=47 // pred_check_branch
          %253 = sbr.rel (%p251) target = $region52
        $region51: #{tpu_custom_call.1} parent=47 // pred_region
          %p254 = scmp.lt.s32.totalorder %s25, 1
          %s255 = scalar_select %p254, %s25, 1
          %s256 = smul.addr %s255, 8
          %s257 = scalar_lea.vmem %s2, %s256
        $region52: #{tpu_custom_call.1} parent=47 // pred_fallthru
          _
      $region48: #{tpu_custom_call.1} parent=5 // pred_fallthru
        _
    $region6: #{tpu_custom_call.1} parent=1 // loop_footer
      %s18 = sadd.s32 1, %s14
    $region7: #{tpu_custom_call.1} parent=1 // loop_footer_branch
      %13 = sbr.rel target = $region3
    $region8: #{tpu_custom_call.1} parent=1 // loop_exit
      _
    %258 = vsyncpa [#allocation3], 1
    %s259 = scalar_lea.sflag [#allocation3], 1
    %260 = vsyncpa %s259, 1
    %261 = vsyncpa [#allocation5], 1
    %s262 = scalar_lea.sflag [#allocation5], 1
    %263 = vsyncpa %s262, 1

</llo_original>
